<compile_context>
chip_gen: v6e
topology: v6e:2x2x1
jax: 0.10.0
libtpu: 0.0.40
codegen_flags: <defaults>
</compile_context>

<pallas_src>
import functools

import jax
import jax.numpy as jnp
from jax.experimental import pallas as pl
from jax.experimental.pallas import tpu as pltpu


def decoder_kernel(x_ref, w1_ref, b1_ref, w2_ref, b2_ref, o_ref, h_ref):
    # hidden = relu(x @ W1 + b1): compute once per batch tile (j == 0) and
    # keep it resident in VMEM scratch for the whole seq-tile sweep.
    @pl.when(pl.program_id(1) == 0)
    def _():
        h = jnp.dot(x_ref[...], w1_ref[...], preferred_element_type=jnp.float32)
        h = jnp.maximum(h + b1_ref[...], 0.0)        # (TM, 512) + (1, 512)
        h_ref[...] = h.astype(jnp.bfloat16)

    # out tile = hidden @ W2[:, j-tile] + b2[j-tile]
    o = jnp.dot(h_ref[...], w2_ref[...], preferred_element_type=jnp.float32)
    o_ref[...] = (o + b2_ref[...]).astype(o_ref.dtype)


def _round_up(x, m):
    return (x + m - 1) // m * m


def decoder_forward(x, w1, b1, w2, b2, *, tm=256, tn=512,
                    out_dtype=jnp.float32):
    """x: (B, smallest_layer) -> (B, seq_length).

    w1: (smallest_layer, 512), b1: (1, 512)
    w2: (512, seq_length),     b2: (1, seq_length)
    (weights transposed vs. PyTorch so the kernel computes y = x @ W + b.)
    """
    B, K = x.shape
    Kw, H = w1.shape
    H2, S = w2.shape
    assert K == Kw and H == H2 and H % 128 == 0

    # Tile sizes: sublane-aligned batch tiles, lane-dense seq tiles.
    TM = min(tm, _round_up(B, 8))
    TN = min(tn, _round_up(S, 128))
    B_pad = _round_up(B, TM)
    S_pad = _round_up(S, TN)

    # Zero-pad batch / seq to tile multiples (extra rows/cols sliced off below).
    if B_pad != B:
        x = jnp.pad(x, ((0, B_pad - B), (0, 0)))
    if S_pad != S:
        w2 = jnp.pad(w2, ((0, 0), (0, S_pad - S)))
        b2 = jnp.pad(b2, ((0, 0), (0, S_pad - S)))

    # bf16 MXU operands, f32 accumulation inside the kernel.
    x_bf = x.astype(jnp.bfloat16)
    w1_bf = w1.astype(jnp.bfloat16)
    w2_bf = w2.astype(jnp.bfloat16)
    b1_f = b1.astype(jnp.float32)
    b2_f = b2.astype(jnp.float32)

    grid = (B_pad // TM, S_pad // TN)

    out_itemsize = jnp.dtype(out_dtype).itemsize
    cost = pl.CostEstimate(
        flops=2 * B_pad * (K * H + H * S_pad),
        transcendentals=0,
        bytes_accessed=(x_bf.size * 2 + w1_bf.size * 2 + w2_bf.size * 2
                        + b1_f.size * 4 + b2_f.size * 4
                        + B_pad * S_pad * out_itemsize),
    )

    out = pl.pallas_call(
        decoder_kernel,
        out_shape=jax.ShapeDtypeStruct((B_pad, S_pad), out_dtype),
        grid=grid,
        in_specs=[
            pl.BlockSpec((TM, K), lambda i, j: (i, 0)),    # x tile
            pl.BlockSpec((K, H), lambda i, j: (0, 0)),     # W1 (resident)
            pl.BlockSpec((1, H), lambda i, j: (0, 0)),     # b1 (resident)
            pl.BlockSpec((H, TN), lambda i, j: (0, j)),    # W2 column slab
            pl.BlockSpec((1, TN), lambda i, j: (0, j)),    # b2 column slab
        ],
        out_specs=pl.BlockSpec((TM, TN), lambda i, j: (i, j)),
        scratch_shapes=[pltpu.VMEM((TM, H), jnp.bfloat16)],  # cached hidden
        compiler_params=pltpu.CompilerParams(
            dimension_semantics=("parallel", "arbitrary"),
            vmem_limit_bytes=32 * 1024 * 1024,
        ),
        cost_estimate=cost,
    )(x_bf, w1_bf, b1_f, w2_bf, b2_f)

    return out[:B, :S]


def init_params(key, smallest_layer, seq_length, hidden=512):
    """Deterministic synthetic parameter init (PyTorch-like uniform fan-in)."""
    k1, k2, k3, k4 = jax.random.split(key, 4)
    lim1 = 1.0 / jnp.sqrt(smallest_layer)
    lim2 = 1.0 / jnp.sqrt(hidden)
    w1 = jax.random.uniform(k1, (smallest_layer, hidden), jnp.float32, -lim1, lim1)
    b1 = jax.random.uniform(k2, (1, hidden), jnp.float32, -lim1, lim1)
    w2 = jax.random.uniform(k3, (hidden, seq_length), jnp.float32, -lim2, lim2)
    b2 = jax.random.uniform(k4, (1, seq_length), jnp.float32, -lim2, lim2)
    return w1, b1, w2, b2


def reference_bf16(x, w1, b1, w2, b2):
    """Same math as the kernel (bf16 MXU operands, f32 accumulation)."""
    h = jnp.dot(x.astype(jnp.bfloat16), w1.astype(jnp.bfloat16),
                preferred_element_type=jnp.float32)
    h = jnp.maximum(h + b1, 0.0)
    o = jnp.dot(h.astype(jnp.bfloat16), w2.astype(jnp.bfloat16),
                preferred_element_type=jnp.float32)
    return o + b2


def reference_f32(x, w1, b1, w2, b2):
    return jnp.maximum(x @ w1 + b1, 0.0) @ w2 + b2


if __name__ == "__main__":
    key = jax.random.PRNGKey(0)

    # Case 1: small, tile-aligned shapes.
    batch, smallest_layer, seq_length = 8, 32, 256
    kx, kp, key = jax.random.split(key, 3)
    x = jax.random.normal(kx, (batch, smallest_layer), dtype=jnp.float32)
    w1, b1, w2, b2 = init_params(kp, smallest_layer, seq_length)

    out = jax.block_until_ready(decoder_forward(x, w1, b1, w2, b2))
    assert out.shape == (batch, seq_length)
    ref_bf = reference_bf16(x, w1, b1, w2, b2)
    ref_f32 = reference_f32(x, w1, b1, w2, b2)
    assert jnp.allclose(out, ref_bf, atol=2e-3, rtol=2e-3)
    assert jnp.allclose(out, ref_f32, atol=5e-2, rtol=5e-2)

    # Case 2: non-aligned batch / seq (exercises padding + slicing).
    batch2, seq2 = 10, 200
    kx2, kp2, _ = jax.random.split(key, 3)
    x2 = jax.random.normal(kx2, (batch2, smallest_layer), dtype=jnp.float32)
    w1b, b1b, w2b, b2b = init_params(kp2, smallest_layer, seq2)

    out2 = jax.block_until_ready(decoder_forward(x2, w1b, b1b, w2b, b2b))
    assert out2.shape == (batch2, seq2)
    ref2 = reference_bf16(x2, w1b, b1b, w2b, b2b)
    assert jnp.allclose(out2, ref2, atol=2e-3, rtol=2e-3)

    print("KERNEL_OK")
</pallas_src>

<mosaic_0001>
module attributes {stable_mosaic.version = 11 : i64} {
  func.func @decoder_kernel(%arg0: i32, %arg1: i32, %arg2: memref<8x32xbf16, #tpu.memory_space<vmem>>, %arg3: memref<32x512xbf16, #tpu.memory_space<vmem>>, %arg4: memref<1x512xf32, #tpu.memory_space<vmem>>, %arg5: memref<512x256xbf16, #tpu.memory_space<vmem>>, %arg6: memref<1x256xf32, #tpu.memory_space<vmem>>, %arg7: memref<8x256xf32, #tpu.memory_space<vmem>>, %arg8: memref<8x512xbf16, #tpu.memory_space<vmem>>) attributes {dimension_semantics = [#tpu.dimension_semantics<parallel>, #tpu.dimension_semantics<arbitrary>], iteration_bounds = array<i64: 1, 1>, scalar_prefetch = 0 : i64, scratch_operands = 1 : i64, tpu.core_type = #tpu.core_type<tc>, window_params = [{transform_indices = @transform_0, window_bounds = array<i64: 8, 32>}, {pipeline_mode = #tpu.pipeline_mode<synchronous>, transform_indices = @transform_1, window_bounds = array<i64: 32, 512>}, {pipeline_mode = #tpu.pipeline_mode<synchronous>, transform_indices = @transform_2, window_bounds = array<i64: 1, 512>}, {transform_indices = @transform_3, window_bounds = array<i64: 512, 256>}, {transform_indices = @transform_4, window_bounds = array<i64: 1, 256>}, {transform_indices = @transform_5, window_bounds = array<i64: 8, 256>}]} {
    %c0_i32 = arith.constant 0 : i32
    %0 = arith.cmpi eq, %arg1, %c0_i32 : i32
    %1 = arith.extui %0 : i1 to i32
    %c0_i32_0 = arith.constant 0 : i32
    %2 = arith.cmpi ne, %1, %c0_i32_0 : i32
    scf.if %2 {
      %c0_8 = arith.constant 0 : index
      %c0_9 = arith.constant 0 : index
      %10 = vector.load %arg2[%c0_8, %c0_9] : memref<8x32xbf16, #tpu.memory_space<vmem>>, vector<8x32xbf16>
      %c0_10 = arith.constant 0 : index
      %c0_11 = arith.constant 0 : index
      %11 = vector.load %arg3[%c0_10, %c0_11] : memref<32x512xbf16, #tpu.memory_space<vmem>>, vector<32x512xbf16>
      %cst_12 = arith.constant dense<0.000000e+00> : vector<8x512xf32>
      %12 = tpu.matmul %10, %11, %cst_12 {dimension_numbers = #tpu.dot_dimension_numbers<[1], [0], [0], [1], [0, 0, 1, 1], [], []>} : vector<8x32xbf16>, vector<32x512xbf16>, vector<8x512xf32> -> vector<8x512xf32>
      %c0_13 = arith.constant 0 : index
      %c0_14 = arith.constant 0 : index
      %13 = vector.load %arg4[%c0_13, %c0_14] : memref<1x512xf32, #tpu.memory_space<vmem>>, vector<1x512xf32>
      %14 = vector.broadcast %13 : vector<1x512xf32> to vector<8x512xf32>
      %15 = arith.addf %12, %14 : vector<8x512xf32>
      %cst_15 = arith.constant 0.000000e+00 : f32
      %16 = vector.broadcast %cst_15 : f32 to vector<8x512xf32>
      %17 = arith.maximumf %15, %16 : vector<8x512xf32>
      %18 = arith.truncf %17 : vector<8x512xf32> to vector<8x512xbf16>
      %c0_16 = arith.constant 0 : index
      %c0_17 = arith.constant 0 : index
      %19 = vector.load %arg8[%c0_16, %c0_17] : memref<8x512xbf16, #tpu.memory_space<vmem>>, vector<8x512xbf16>
      tpu.vector_store %arg8[%c0_16, %c0_17], %18 {strides = array<i32>} : memref<8x512xbf16, #tpu.memory_space<vmem>>, vector<8x512xbf16>,
    } else {
    }
    %c0 = arith.constant 0 : index
    %c0_1 = arith.constant 0 : index
    %3 = vector.load %arg8[%c0, %c0_1] : memref<8x512xbf16, #tpu.memory_space<vmem>>, vector<8x512xbf16>
    %c0_2 = arith.constant 0 : index
    %c0_3 = arith.constant 0 : index
    %4 = vector.load %arg5[%c0_2, %c0_3] : memref<512x256xbf16, #tpu.memory_space<vmem>>, vector<512x256xbf16>
    %cst = arith.constant dense<0.000000e+00> : vector<8x256xf32>
    %5 = tpu.matmul %3, %4, %cst {dimension_numbers = #tpu.dot_dimension_numbers<[1], [0], [0], [1], [0, 0, 1, 1], [], []>} : vector<8x512xbf16>, vector<512x256xbf16>, vector<8x256xf32> -> vector<8x256xf32>
    %c0_4 = arith.constant 0 : index
    %c0_5 = arith.constant 0 : index
    %6 = vector.load %arg6[%c0_4, %c0_5] : memref<1x256xf32, #tpu.memory_space<vmem>>, vector<1x256xf32>
    %7 = vector.broadcast %6 : vector<1x256xf32> to vector<8x256xf32>
    %8 = arith.addf %5, %7 : vector<8x256xf32>
    %c0_6 = arith.constant 0 : index
    %c0_7 = arith.constant 0 : index
    %9 = vector.load %arg7[%c0_6, %c0_7] : memref<8x256xf32, #tpu.memory_space<vmem>>, vector<8x256xf32>
    tpu.vector_store %arg7[%c0_6, %c0_7], %8 {strides = array<i32>} : memref<8x256xf32, #tpu.memory_space<vmem>>, vector<8x256xf32>,
    return
  }
  func.func @transform_0(%arg0: i32, %arg1: i32) -> (i32, i32) {
    %c0_i32 = arith.constant 0 : i32
    %c0_i32_0 = arith.constant 0 : i32
    return %arg0, %c0_i32 : i32, i32
  }
  func.func @transform_1(%arg0: i32, %arg1: i32) -> (i32, i32) {
    %c0_i32 = arith.constant 0 : i32
    %c0_i32_0 = arith.constant 0 : i32
    %c0_i32_1 = arith.constant 0 : i32
    return %c0_i32, %c0_i32_0 : i32, i32
  }
  func.func @transform_2(%arg0: i32, %arg1: i32) -> (i32, i32) {
    %c0_i32 = arith.constant 0 : i32
    %c0_i32_0 = arith.constant 0 : i32
    %c0_i32_1 = arith.constant 0 : i32
    return %c0_i32, %c0_i32_0 : i32, i32
  }
  func.func @transform_3(%arg0: i32, %arg1: i32) -> (i32, i32) {
    %c0_i32 = arith.constant 0 : i32
    %c0_i32_0 = arith.constant 0 : i32
    return %c0_i32, %arg1 : i32, i32
  }
  func.func @transform_4(%arg0: i32, %arg1: i32) -> (i32, i32) {
    %c0_i32 = arith.constant 0 : i32
    %c0_i32_0 = arith.constant 0 : i32
    return %c0_i32, %arg1 : i32, i32
  }
  func.func @transform_5(%arg0: i32, %arg1: i32) -> (i32, i32) {
    %c0_i32 = arith.constant 0 : i32
    return %arg0, %arg1 : i32, i32
  }
}

</mosaic_0001>

<llo_original>
// kernel: tpu_custom_call.1
$region0: #{tpu_custom_call.1}
  #allocation0 [shape = 'u32[]', space=smem, size = 0x4, offset = 0x4, fixed_abs, tag = 'smem constant byte address 0x4 - core index']
  #allocation1 [shape = 'u32[144,128]{1,0:T(1,128)}', space=vmem, size = 0x12000, scoped, tag = 'internal scratch']
  #allocation2 [shape = 'bf16[8,512]{1,0:T(8,128)(2,1)}', space=vmem, size = 0x2000, scoped, tag = 'scratch operand']
  %s0 = inlined_call_operand.hbm [shape: bf16[8,32], index: 0, kind: input, shape index: {}]
  %s1 = inlined_call_operand.hbm [shape: bf16[32,512], index: 1, kind: input, shape index: {}]
  %s2 = inlined_call_operand.hbm [shape: f32[1,512], index: 2, kind: input, shape index: {}]
  %s3 = inlined_call_operand.hbm [shape: bf16[512,256], index: 3, kind: input, shape index: {}]
  %s4 = inlined_call_operand.vmem [shape: f32[1,256], index: 4, kind: input, shape index: {}]
  %s5 = inlined_call_operand.hbm [shape: f32[8,256], index: 5, kind: output, shape index: {}]
  %s6 = sld [smem:[#allocation0]]
  $region50: #{tpu_custom_call.1} parent=0
    _
  %s8 = ssub.s32 1, %s6
  %s9 = scalar_select 0, %s8, %s6
  $region1: #{tpu_custom_call.1} parent=0
    #allocation3 [shape = 'u8[2048]{0}', space=vmem, size = 0x800, scoped, tag = 'input window, operand 0, single buffered']
    #allocation4 [shape = 's32[1]{0}', space=sflag, size = 0x4, scoped, tag = 'scoped memory for tpu_custom_call.1']
    #allocation5 [shape = 's32[1]{0}', space=sflag, size = 0x4, scoped, tag = 'scoped memory for tpu_custom_call.1']
    #allocation6 [shape = 'u8[32768]{0}', space=vmem, size = 0x8000, scoped, tag = 'input window, operand 1, single buffered']
    #allocation7 [shape = 's32[1]{0}', space=sflag, size = 0x4, scoped, tag = 'scoped memory for tpu_custom_call.1']
    #allocation8 [shape = 'u8[2048]{0}', space=vmem, size = 0x800, scoped, tag = 'input window, operand 2, single buffered']
    #allocation9 [shape = 'u8[262144]{0}', space=vmem, size = 0x40000, scoped, tag = 'input window, operand 3, single buffered']
    #allocation10 [shape = 's32[1]{0}', space=sflag, size = 0x4, scoped, tag = 'scoped memory for tpu_custom_call.1']
    #allocation11 [shape = 'u8[8192]{0}', space=vmem, size = 0x2000, scoped, tag = 'output window, operand 0, single buffered']
    %10 = vsyncpa [#allocation4], 0
    %11 = vsyncpa [#allocation7], 0
    %12 = vsyncpa [#allocation10], 0
    %13 = vsyncpa [#allocation5], 0
    // Predicated region
    $region2: #{tpu_custom_call.1} parent=1 // pred_check
      _
    $region3: #{tpu_custom_call.1} parent=1 // pred_check_branch
      %15 = sbr.rel (0) target = $region5
    $region4: #{tpu_custom_call.1} parent=1 // pred_region
      %s17 = ssub.s32 64, 64
      %18 = vsyncadd [#allocation4], %s17
      %s20 = sshll.u32 [#allocation3], 4
      %s21 = int_to_ptr.vmem [resolvable:$true] %s20
      %23 = dma.hbm_to_vmem [thread:$0]  %s0, 64, %s21, [#allocation4]
    $region5: #{tpu_custom_call.1} parent=1 // pred_fallthru
      _
    // Predicated region
    $region6: #{tpu_custom_call.1} parent=1 // pred_check
      _
    $region7: #{tpu_custom_call.1} parent=1 // pred_check_branch
      %25 = sbr.rel (0) target = $region9
    $region8: #{tpu_custom_call.1} parent=1 // pred_region
      %s27 = ssub.s32 1024, 1024
      %28 = vsyncadd [#allocation7], %s27
      %s29 = sshll.u32 [#allocation6], 4
      %s30 = int_to_ptr.vmem [resolvable:$true] %s29
      %35 = dma.hbm_to_vmem [thread:$0]  %s1, 1024, %s30, [#allocation7], 256, 256, 16
    $region9: #{tpu_custom_call.1} parent=1 // pred_fallthru
      _
    // Predicated region
    $region10: #{tpu_custom_call.1} parent=1 // pred_check
      _
    $region11: #{tpu_custom_call.1} parent=1 // pred_check_branch
      %37 = sbr.rel (0) target = $region13
    $region12: #{tpu_custom_call.1} parent=1 // pred_region
      %s39 = ssub.s32 64, 64
      %40 = vsyncadd [#allocation7], %s39
      %s42 = sshll.u32 [#allocation8], 4
      %s43 = int_to_ptr.vmem [resolvable:$true] %s42
      %45 = dma.hbm_to_vmem [thread:$0]  %s2, 64, %s43, [#allocation7]
    $region13: #{tpu_custom_call.1} parent=1 // pred_fallthru
      _
    // Predicated region
    $region14: #{tpu_custom_call.1} parent=1 // pred_check
      _
    $region15: #{tpu_custom_call.1} parent=1 // pred_check_branch
      %47 = sbr.rel (0) target = $region17
    $region16: #{tpu_custom_call.1} parent=1 // pred_region
      %s49 = ssub.s32 8192, 8192
      %50 = vsyncadd [#allocation10], %s49
      %s51 = sshll.u32 [#allocation9], 4
      %s52 = int_to_ptr.vmem [resolvable:$true] %s51
      %57 = dma.hbm_to_vmem [thread:$0]  %s3, 8192, %s52, [#allocation10], 128, 128, 8
    $region17: #{tpu_custom_call.1} parent=1 // pred_fallthru
      _
    // Predicated region
    $region18: #{tpu_custom_call.1} parent=1 // pred_check
      _
    $region19: #{tpu_custom_call.1} parent=1 // pred_check_branch
      %59 = sbr.rel (0) target = $region21
    $region20: #{tpu_custom_call.1} parent=1 // pred_region
      _
    $region21: #{tpu_custom_call.1} parent=1 // pred_fallthru
      _
    // Predicated region
    $region22: #{tpu_custom_call.1} parent=1 // pred_check
      _
    $region23: #{tpu_custom_call.1} parent=1 // pred_check_branch
      %61 = sbr.rel (0) target = $region25
    $region24: #{tpu_custom_call.1} parent=1 // pred_region
      %62 = dma.done [#allocation4], 64
    $region25: #{tpu_custom_call.1} parent=1 // pred_fallthru
      _
    // Predicated region
    $region26: #{tpu_custom_call.1} parent=1 // pred_check
      _
    $region27: #{tpu_custom_call.1} parent=1 // pred_check_branch
      %64 = sbr.rel (0) target = $region29
    $region28: #{tpu_custom_call.1} parent=1 // pred_region
      %65 = dma.done [#allocation7], 1024
    $region29: #{tpu_custom_call.1} parent=1 // pred_fallthru
      _
    // Predicated region
    $region30: #{tpu_custom_call.1} parent=1 // pred_check
      _
    $region31: #{tpu_custom_call.1} parent=1 // pred_check_branch
      %67 = sbr.rel (0) target = $region33
    $region32: #{tpu_custom_call.1} parent=1 // pred_region
      %68 = dma.done [#allocation7], 64
    $region33: #{tpu_custom_call.1} parent=1 // pred_fallthru
      _
    // Predicated region
    $region34: #{tpu_custom_call.1} parent=1 // pred_check
      _
    $region35: #{tpu_custom_call.1} parent=1 // pred_check_branch
      %70 = sbr.rel (0) target = $region37
    $region36: #{tpu_custom_call.1} parent=1 // pred_region
      %71 = dma.done [#allocation10], 8192
    $region37: #{tpu_custom_call.1} parent=1 // pred_fallthru
      _
    %p73 = scmp.eq.s32.totalorder 0, 0
    // Predicated region
    $region38: #{tpu_custom_call.1} parent=1 // pred_check
      %p74 = pneg %p73
    $region39: #{tpu_custom_call.1} parent=1 // pred_check_branch
      %76 = sbr.rel (%p74) target = $region41
    $region40: #{tpu_custom_call.1} parent=1 // pred_region
      %v77 = vld [vmem:[#allocation3] sm:$0xf]
      %v78 = vld [vmem:[#allocation6] sm:$0xff]
      %v79 = vld [vmem:[#allocation6 + $0x8] sm:$0xff]
      %v80 = vld [vmem:[#allocation6 + $0x10] sm:$0xff]
      %v81 = vld [vmem:[#allocation6 + $0x18] sm:$0xff]
      %v82 = vld [vmem:[#allocation6 + $0x20] sm:$0xff]
      %v83 = vld [vmem:[#allocation6 + $0x28] sm:$0xff]
      %v84 = vld [vmem:[#allocation6 + $0x30] sm:$0xff]
      %v85 = vld [vmem:[#allocation6 + $0x38] sm:$0xff]
      %v86 = vld [vmem:[#allocation8] sm:$0xf]
      %v88 = vlaneseq
      %v89 = vshrl.u32 %v88, 7
      %v90 = vsub.s32 0, %v89
      %v91 = vrot.slane %v86, %v90
      %v92 = vlaneseq
      %v93 = vshrl.u32 %v92, 7
      %v94 = vsub.s32 1, %v93
      %v95 = vrot.slane %v86, %v94
      %v96 = vlaneseq
      %v97 = vshrl.u32 %v96, 7
      %v98 = vsub.s32 2, %v97
      %v99 = vrot.slane %v86, %v98
      %v100 = vlaneseq
      %v101 = vshrl.u32 %v100, 7
      %v102 = vsub.s32 3, %v101
      %v103 = vrot.slane %v86, %v102
      %v116 = vunpack.c.l.b16 %v78
      %v117 = vunpack.c.h.b16 %v78
      %v118 = vunpack.c.l.b16 %v79
      %v119 = vunpack.c.h.b16 %v79
      %v120 = vunpack.c.l.b16 %v80
      %v121 = vunpack.c.h.b16 %v80
      %v122 = vunpack.c.l.b16 %v81
      %v123 = vunpack.c.h.b16 %v81
      %v124 = vunpack.c.l.b16 %v82
      %v125 = vunpack.c.h.b16 %v82
      %v126 = vunpack.c.l.b16 %v83
      %v127 = vunpack.c.h.b16 %v83
      %v128 = vunpack.c.l.b16 %v84
      %v129 = vunpack.c.h.b16 %v84
      %v130 = vunpack.c.l.b16 %v85
      %v131 = vunpack.c.h.b16 %v85
      %v132 = vpack.c.b16 %v120, %v116
      %v133 = vpack.c.b16 %v121, %v117
      %v134 = vpack.c.b16 %v122, %v118
      %v135 = vpack.c.b16 %v123, %v119
      %v136 = vpack.c.b16 %v128, %v124
      %v137 = vpack.c.b16 %v129, %v125
      %v138 = vpack.c.b16 %v130, %v126
      %v139 = vpack.c.b16 %v131, %v127
      %vm148 = vcmask 261120
      %v150 = vsel %vm148, %v77, 0
      %152 = vmatprep.subr.bf16.mxu0 0
      %153 = vmatpush1.bf16.msra.mxu0 0
      %154 = vmatprep.subr.bf16.mxu0 0
      %155 = vmatpush1.bf16.msra.mxu0 0
      %156 = vmatprep.subr.bf16.mxu0 0
      %157 = vmatpush1.bf16.msra.mxu0 0
      %158 = vmatprep.subr.bf16.mxu0 0
      %159 = vmatpush1.bf16.msra.mxu0 0
      %160 = vmatprep.subr.bf16.mxu0 0
      %161 = vmatpush1.bf16.msra.mxu0 0
      %162 = vmatprep.subr.bf16.mxu0 0
      %163 = vmatpush1.bf16.msra.mxu0 0
      %164 = vmatprep.subr.bf16.mxu0 %v137
      %165 = vmatpush1.bf16.msra.mxu0 %v136
      %166 = vmatprep.subr.bf16.mxu0 %v133
      %167 = vmatpush1.bf16.msra.mxu0 %v132
      %168 = vmatprep.subr.bf16.mxu0 0
      %169 = vmatpush2.bf16.msra.mxu0 0
      %170 = vmatprep.subr.bf16.mxu0 0
      %171 = vmatpush2.bf16.msra.mxu0 0
      %172 = vmatprep.subr.bf16.mxu0 0
      %173 = vmatpush2.bf16.msra.mxu0 0
      %174 = vmatprep.subr.bf16.mxu0 0
      %175 = vmatpush2.bf16.msra.mxu0 0
      %176 = vmatprep.subr.bf16.mxu0 0
      %177 = vmatpush2.bf16.msra.mxu0 0
      %178 = vmatprep.subr.bf16.mxu0 0
      %179 = vmatpush2.bf16.msra.mxu0 0
      %180 = vmatprep.subr.bf16.mxu0 0
      %181 = vmatpush2.bf16.msra.mxu0 0
      %182 = vmatprep.subr.bf16.mxu0 0
      %183 = vmatpush2.bf16.msra.mxu0 0
      %184 = vmatprep.mubr.bf16.mxu0 0
      %185 = vmatmul.mubr.bf16.gmra.mxu0 %v150
      %v186 = vpop.f32.mrf.mxu0
      %v187 = vadd.f32 %v91, %v186
      %v188 = vpop.f32.mrf.mxu0
      %v189 = vadd.f32 %v95, %v188
      %v190 = vpop.f32.mrf.mxu0
      %v191 = vpop.f32.mrf.mxu0
      %192 = vdwg.mxu0
      %193 = vmatprep.subr.bf16.mxu0 0
      %194 = vmatpush1.bf16.msra.mxu0 0
      %195 = vmatprep.subr.bf16.mxu0 0
      %196 = vmatpush1.bf16.msra.mxu0 0
      %197 = vmatprep.subr.bf16.mxu0 0
      %198 = vmatpush1.bf16.msra.mxu0 0
      %199 = vmatprep.subr.bf16.mxu0 0
      %200 = vmatpush1.bf16.msra.mxu0 0
      %201 = vmatprep.subr.bf16.mxu0 0
      %202 = vmatpush1.bf16.msra.mxu0 0
      %203 = vmatprep.subr.bf16.mxu0 0
      %204 = vmatpush1.bf16.msra.mxu0 0
      %205 = vmatprep.subr.bf16.mxu0 %v139
      %206 = vmatpush1.bf16.msra.mxu0 %v138
      %207 = vmatprep.subr.bf16.mxu0 %v135
      %208 = vmatpush1.bf16.msra.mxu0 %v134
      %209 = vmatprep.subr.bf16.mxu0 0
      %210 = vmatpush2.bf16.msra.mxu0 0
      %211 = vmatprep.subr.bf16.mxu0 0
      %212 = vmatpush2.bf16.msra.mxu0 0
      %213 = vmatprep.subr.bf16.mxu0 0
      %214 = vmatpush2.bf16.msra.mxu0 0
      %215 = vmatprep.subr.bf16.mxu0 0
      %216 = vmatpush2.bf16.msra.mxu0 0
      %217 = vmatprep.subr.bf16.mxu0 0
      %218 = vmatpush2.bf16.msra.mxu0 0
      %219 = vmatprep.subr.bf16.mxu0 0
      %220 = vmatpush2.bf16.msra.mxu0 0
      %221 = vmatprep.subr.bf16.mxu0 0
      %222 = vmatpush2.bf16.msra.mxu0 0
      %223 = vmatprep.subr.bf16.mxu0 0
      %224 = vmatpush2.bf16.msra.mxu0 0
      %225 = vmatprep.mubr.bf16.mxu0 0
      %226 = vmatmul.mubr.bf16.gmra.mxu0 %v150
      %v227 = vpop.f32.mrf.mxu0
      %v228 = vadd.f32 %v99, %v227
      %v229 = vpop.f32.mrf.mxu0
      %v230 = vadd.f32 %v103, %v229
      %v231 = vpop.f32.mrf.mxu0
      %v232 = vpop.f32.mrf.mxu0
      %233 = vdwg.mxu0
      %v234 = vmax.f32 %v187, 0.0
      %v235 = vmax.f32 %v189, 0.0
      %v236 = vmax.f32 %v228, 0.0
      %v237 = vmax.f32 %v230, 0.0
      %v238 = vpack.c.bf16 %v234, %v234
      %v239 = vpack.c.bf16 %v235, %v235
      %v240 = vpack.c.bf16 %v236, %v236
      %v241 = vpack.c.bf16 %v237, %v237
      %v246 = vunpack.c.l.b16 %v238
      %v247 = vunpack.c.l.b16 %v239
      %v248 = vunpack.c.l.b16 %v240
      %v249 = vunpack.c.l.b16 %v241
      %v250 = vpack.c.b16 %v247, %v246
      %v251 = vpack.c.b16 %v249, %v248
      %254 = vst [vmem:[#allocation2] sm:$0xff] %v250
      %255 = vst [vmem:[#allocation2 + $0x8] sm:$0xff] %v251
    $region41: #{tpu_custom_call.1} parent=1 // pred_fallthru
      _
    %v256 = vld [vmem:[#allocation2] sm:$0xff]
    %v257 = vld [vmem:[#allocation2 + $0x8] sm:$0xff]
    %v258 = vld [vmem:[#allocation9] sm:$0xff]
    %v259 = vld [vmem:[#allocation9 + $0x8] sm:$0xff]
    %v260 = vld [vmem:[#allocation9 + $0x10] sm:$0xff]
    %v261 = vld [vmem:[#allocation9 + $0x18] sm:$0xff]
    %v262 = vld [vmem:[#allocation9 + $0x20] sm:$0xff]
    %v263 = vld [vmem:[#allocation9 + $0x28] sm:$0xff]
    %v264 = vld [vmem:[#allocation9 + $0x30] sm:$0xff]
    %v265 = vld [vmem:[#allocation9 + $0x38] sm:$0xff]
    %v266 = vld [vmem:[#allocation9 + $0x40] sm:$0xff]
    %v267 = vld [vmem:[#allocation9 + $0x48] sm:$0xff]
    %v268 = vld [vmem:[#allocation9 + $0x50] sm:$0xff]
    %v269 = vld [vmem:[#allocation9 + $0x58] sm:$0xff]
    %v270 = vld [vmem:[#allocation9 + $0x60] sm:$0xff]
    %v271 = vld [vmem:[#allocation9 + $0x68] sm:$0xff]
    %v272 = vld [vmem:[#allocation9 + $0x70] sm:$0xff]
    %v273 = vld [vmem:[#allocation9 + $0x78] sm:$0xff]
    %v274 = vld [vmem:[#allocation9 + $0x80] sm:$0xff]
    %v275 = vld [vmem:[#allocation9 + $0x88] sm:$0xff]
    %v276 = vld [vmem:[#allocation9 + $0x90] sm:$0xff]
    %v277 = vld [vmem:[#allocation9 + $0x98] sm:$0xff]
    %v278 = vld [vmem:[#allocation9 + $0xa0] sm:$0xff]
    %v279 = vld [vmem:[#allocation9 + $0xa8] sm:$0xff]
    %v280 = vld [vmem:[#allocation9 + $0xb0] sm:$0xff]
    %v281 = vld [vmem:[#allocation9 + $0xb8] sm:$0xff]
    %v282 = vld [vmem:[#allocation9 + $0xc0] sm:$0xff]
    %v283 = vld [vmem:[#allocation9 + $0xc8] sm:$0xff]
    %v284 = vld [vmem:[#allocation9 + $0xd0] sm:$0xff]
    %v285 = vld [vmem:[#allocation9 + $0xd8] sm:$0xff]
    %v286 = vld [vmem:[#allocation9 + $0xe0] sm:$0xff]
    %v287 = vld [vmem:[#allocation9 + $0xe8] sm:$0xff]
    %v288 = vld [vmem:[#allocation9 + $0xf0] sm:$0xff]
    %v289 = vld [vmem:[#allocation9 + $0xf8] sm:$0xff]
    %v290 = vld [vmem:[#allocation9 + $0x100] sm:$0xff]
    %v291 = vld [vmem:[#allocation9 + $0x108] sm:$0xff]
    %v292 = vld [vmem:[#allocation9 + $0x110] sm:$0xff]
    %v293 = vld [vmem:[#allocation9 + $0x118] sm:$0xff]
    %v294 = vld [vmem:[#allocation9 + $0x120] sm:$0xff]
    %v295 = vld [vmem:[#allocation9 + $0x128] sm:$0xff]
    %v296 = vld [vmem:[#allocation9 + $0x130] sm:$0xff]
    %v297 = vld [vmem:[#allocation9 + $0x138] sm:$0xff]
    %v298 = vld [vmem:[#allocation9 + $0x140] sm:$0xff]
    %v299 = vld [vmem:[#allocation9 + $0x148] sm:$0xff]
    %v300 = vld [vmem:[#allocation9 + $0x150] sm:$0xff]
    %v301 = vld [vmem:[#allocation9 + $0x158] sm:$0xff]
    %v302 = vld [vmem:[#allocation9 + $0x160] sm:$0xff]
    %v303 = vld [vmem:[#allocation9 + $0x168] sm:$0xff]
    %v304 = vld [vmem:[#allocation9 + $0x170] sm:$0xff]
    %v305 = vld [vmem:[#allocation9 + $0x178] sm:$0xff]
    %v306 = vld [vmem:[#allocation9 + $0x180] sm:$0xff]
    %v307 = vld [vmem:[#allocation9 + $0x188] sm:$0xff]
    %v308 = vld [vmem:[#allocation9 + $0x190] sm:$0xff]
    %v309 = vld [vmem:[#allocation9 + $0x198] sm:$0xff]
    %v310 = vld [vmem:[#allocation9 + $0x1a0] sm:$0xff]
    %v311 = vld [vmem:[#allocation9 + $0x1a8] sm:$0xff]
    %v312 = vld [vmem:[#allocation9 + $0x1b0] sm:$0xff]
    %v313 = vld [vmem:[#allocation9 + $0x1b8] sm:$0xff]
    %v314 = vld [vmem:[#allocation9 + $0x1c0] sm:$0xff]
    %v315 = vld [vmem:[#allocation9 + $0x1c8] sm:$0xff]
    %v316 = vld [vmem:[#allocation9 + $0x1d0] sm:$0xff]
    %v317 = vld [vmem:[#allocation9 + $0x1d8] sm:$0xff]
    %v318 = vld [vmem:[#allocation9 + $0x1e0] sm:$0xff]
    %v319 = vld [vmem:[#allocation9 + $0x1e8] sm:$0xff]
    %v320 = vld [vmem:[#allocation9 + $0x1f0] sm:$0xff]
    %v321 = vld [vmem:[#allocation9 + $0x1f8] sm:$0xff]
    %v322 = vld [vmem:[%s4] sm:$0x3]
    %v324 = vlaneseq
    %v325 = vshrl.u32 %v324, 7
    %v326 = vsub.s32 0, %v325
    %v327 = vrot.slane %v322, %v326
    %v328 = vlaneseq
    %v329 = vshrl.u32 %v328, 7
    %v330 = vsub.s32 1, %v329
    %v331 = vrot.slane %v322, %v330
    %v336 = vunpack.c.l.b16 %v256
    %v337 = vunpack.c.h.b16 %v256
    %v338 = vunpack.c.l.b16 %v257
    %v339 = vunpack.c.h.b16 %v257
    %v340 = vpack.c.b16 %v336, %v336
    %v341 = vpack.c.b16 %v337, %v337
    %v342 = vpack.c.b16 %v338, %v338
    %v343 = vpack.c.b16 %v339, %v339
    %v412 = vunpack.c.l.b16 %v258
    %v413 = vunpack.c.h.b16 %v258
    %v414 = vunpack.c.l.b16 %v259
    %v415 = vunpack.c.h.b16 %v259
    %v416 = vunpack.c.l.b16 %v260
    %v417 = vunpack.c.h.b16 %v260
    %v418 = vunpack.c.l.b16 %v261
    %v419 = vunpack.c.h.b16 %v261
    %v420 = vunpack.c.l.b16 %v262
    %v421 = vunpack.c.h.b16 %v262
    %v422 = vunpack.c.l.b16 %v263
    %v423 = vunpack.c.h.b16 %v263
    %v424 = vunpack.c.l.b16 %v264
    %v425 = vunpack.c.h.b16 %v264
    %v426 = vunpack.c.l.b16 %v265
    %v427 = vunpack.c.h.b16 %v265
    %v428 = vunpack.c.l.b16 %v266
    %v429 = vunpack.c.h.b16 %v266
    %v430 = vunpack.c.l.b16 %v267
    %v431 = vunpack.c.h.b16 %v267
    %v432 = vunpack.c.l.b16 %v268
    %v433 = vunpack.c.h.b16 %v268
    %v434 = vunpack.c.l.b16 %v269
    %v435 = vunpack.c.h.b16 %v269
    %v436 = vunpack.c.l.b16 %v270
    %v437 = vunpack.c.h.b16 %v270
    %v438 = vunpack.c.l.b16 %v271
    %v439 = vunpack.c.h.b16 %v271
    %v440 = vunpack.c.l.b16 %v272
    %v441 = vunpack.c.h.b16 %v272
    %v442 = vunpack.c.l.b16 %v273
    %v443 = vunpack.c.h.b16 %v273
    %v444 = vunpack.c.l.b16 %v274
    %v445 = vunpack.c.h.b16 %v274
    %v446 = vunpack.c.l.b16 %v275
    %v447 = vunpack.c.h.b16 %v275
    %v448 = vunpack.c.l.b16 %v276
    %v449 = vunpack.c.h.b16 %v276
    %v450 = vunpack.c.l.b16 %v277
    %v451 = vunpack.c.h.b16 %v277
    %v452 = vunpack.c.l.b16 %v278
    %v453 = vunpack.c.h.b16 %v278
    %v454 = vunpack.c.l.b16 %v279
    %v455 = vunpack.c.h.b16 %v279
    %v456 = vunpack.c.l.b16 %v280
    %v457 = vunpack.c.h.b16 %v280
    %v458 = vunpack.c.l.b16 %v281
    %v459 = vunpack.c.h.b16 %v281
    %v460 = vunpack.c.l.b16 %v282
    %v461 = vunpack.c.h.b16 %v282
    %v462 = vunpack.c.l.b16 %v283
    %v463 = vunpack.c.h.b16 %v283
    %v464 = vunpack.c.l.b16 %v284
    %v465 = vunpack.c.h.b16 %v284
    %v466 = vunpack.c.l.b16 %v285
    %v467 = vunpack.c.h.b16 %v285
    %v468 = vunpack.c.l.b16 %v286
    %v469 = vunpack.c.h.b16 %v286
    %v470 = vunpack.c.l.b16 %v287
    %v471 = vunpack.c.h.b16 %v287
    %v472 = vunpack.c.l.b16 %v288
    %v473 = vunpack.c.h.b16 %v288
    %v474 = vunpack.c.l.b16 %v289
    %v475 = vunpack.c.h.b16 %v289
    %v476 = vunpack.c.l.b16 %v290
    %v477 = vunpack.c.h.b16 %v290
    %v478 = vunpack.c.l.b16 %v291
    %v479 = vunpack.c.h.b16 %v291
    %v480 = vunpack.c.l.b16 %v292
    %v481 = vunpack.c.h.b16 %v292
    %v482 = vunpack.c.l.b16 %v293
    %v483 = vunpack.c.h.b16 %v293
    %v484 = vunpack.c.l.b16 %v294
    %v485 = vunpack.c.h.b16 %v294
    %v486 = vunpack.c.l.b16 %v295
    %v487 = vunpack.c.h.b16 %v295
    %v488 = vunpack.c.l.b16 %v296
    %v489 = vunpack.c.h.b16 %v296
    %v490 = vunpack.c.l.b16 %v297
    %v491 = vunpack.c.h.b16 %v297
    %v492 = vunpack.c.l.b16 %v298
    %v493 = vunpack.c.h.b16 %v298
    %v494 = vunpack.c.l.b16 %v299
    %v495 = vunpack.c.h.b16 %v299
    %v496 = vunpack.c.l.b16 %v300
    %v497 = vunpack.c.h.b16 %v300
    %v498 = vunpack.c.l.b16 %v301
    %v499 = vunpack.c.h.b16 %v301
    %v500 = vunpack.c.l.b16 %v302
    %v501 = vunpack.c.h.b16 %v302
    %v502 = vunpack.c.l.b16 %v303
    %v503 = vunpack.c.h.b16 %v303
    %v504 = vunpack.c.l.b16 %v304
    %v505 = vunpack.c.h.b16 %v304
    %v506 = vunpack.c.l.b16 %v305
    %v507 = vunpack.c.h.b16 %v305
    %v508 = vunpack.c.l.b16 %v306
    %v509 = vunpack.c.h.b16 %v306
    %v510 = vunpack.c.l.b16 %v307
    %v511 = vunpack.c.h.b16 %v307
    %v512 = vunpack.c.l.b16 %v308
    %v513 = vunpack.c.h.b16 %v308
    %v514 = vunpack.c.l.b16 %v309
    %v515 = vunpack.c.h.b16 %v309
    %v516 = vunpack.c.l.b16 %v310
    %v517 = vunpack.c.h.b16 %v310
    %v518 = vunpack.c.l.b16 %v311
    %v519 = vunpack.c.h.b16 %v311
    %v520 = vunpack.c.l.b16 %v312
    %v521 = vunpack.c.h.b16 %v312
    %v522 = vunpack.c.l.b16 %v313
    %v523 = vunpack.c.h.b16 %v313
    %v524 = vunpack.c.l.b16 %v314
    %v525 = vunpack.c.h.b16 %v314
    %v526 = vunpack.c.l.b16 %v315
    %v527 = vunpack.c.h.b16 %v315
    %v528 = vunpack.c.l.b16 %v316
    %v529 = vunpack.c.h.b16 %v316
    %v530 = vunpack.c.l.b16 %v317
    %v531 = vunpack.c.h.b16 %v317
    %v532 = vunpack.c.l.b16 %v318
    %v533 = vunpack.c.h.b16 %v318
    %v534 = vunpack.c.l.b16 %v319
    %v535 = vunpack.c.h.b16 %v319
    %v536 = vunpack.c.l.b16 %v320
    %v537 = vunpack.c.h.b16 %v320
    %v538 = vunpack.c.l.b16 %v321
    %v539 = vunpack.c.h.b16 %v321
    %v540 = vpack.c.b16 %v414, %v412
    %v541 = vpack.c.b16 %v415, %v413
    %v542 = vpack.c.b16 %v418, %v416
    %v543 = vpack.c.b16 %v419, %v417
    %v544 = vpack.c.b16 %v422, %v420
    %v545 = vpack.c.b16 %v423, %v421
    %v546 = vpack.c.b16 %v426, %v424
    %v547 = vpack.c.b16 %v427, %v425
    %v548 = vpack.c.b16 %v430, %v428
    %v549 = vpack.c.b16 %v431, %v429
    %v550 = vpack.c.b16 %v434, %v432
    %v551 = vpack.c.b16 %v435, %v433
    %v552 = vpack.c.b16 %v438, %v436
    %v553 = vpack.c.b16 %v439, %v437
    %v554 = vpack.c.b16 %v442, %v440
    %v555 = vpack.c.b16 %v443, %v441
    %v556 = vpack.c.b16 %v446, %v444
    %v557 = vpack.c.b16 %v447, %v445
    %v558 = vpack.c.b16 %v450, %v448
    %v559 = vpack.c.b16 %v451, %v449
    %v560 = vpack.c.b16 %v454, %v452
    %v561 = vpack.c.b16 %v455, %v453
    %v562 = vpack.c.b16 %v458, %v456
    %v563 = vpack.c.b16 %v459, %v457
    %v564 = vpack.c.b16 %v462, %v460
    %v565 = vpack.c.b16 %v463, %v461
    %v566 = vpack.c.b16 %v466, %v464
    %v567 = vpack.c.b16 %v467, %v465
    %v568 = vpack.c.b16 %v470, %v468
    %v569 = vpack.c.b16 %v471, %v469
    %v570 = vpack.c.b16 %v474, %v472
    %v571 = vpack.c.b16 %v475, %v473
    %v572 = vpack.c.b16 %v478, %v476
    %v573 = vpack.c.b16 %v479, %v477
    %v574 = vpack.c.b16 %v482, %v480
    %v575 = vpack.c.b16 %v483, %v481
    %v576 = vpack.c.b16 %v486, %v484
    %v577 = vpack.c.b16 %v487, %v485
    %v578 = vpack.c.b16 %v490, %v488
    %v579 = vpack.c.b16 %v491, %v489
    %v580 = vpack.c.b16 %v494, %v492
    %v581 = vpack.c.b16 %v495, %v493
    %v582 = vpack.c.b16 %v498, %v496
    %v583 = vpack.c.b16 %v499, %v497
    %v584 = vpack.c.b16 %v502, %v500
    %v585 = vpack.c.b16 %v503, %v501
    %v586 = vpack.c.b16 %v506, %v504
    %v587 = vpack.c.b16 %v507, %v505
    %v588 = vpack.c.b16 %v510, %v508
    %v589 = vpack.c.b16 %v511, %v509
    %v590 = vpack.c.b16 %v514, %v512
    %v591 = vpack.c.b16 %v515, %v513
    %v592 = vpack.c.b16 %v518, %v516
    %v593 = vpack.c.b16 %v519, %v517
    %v594 = vpack.c.b16 %v522, %v520
    %v595 = vpack.c.b16 %v523, %v521
    %v596 = vpack.c.b16 %v526, %v524
    %v597 = vpack.c.b16 %v527, %v525
    %v598 = vpack.c.b16 %v530, %v528
    %v599 = vpack.c.b16 %v531, %v529
    %v600 = vpack.c.b16 %v534, %v532
    %v601 = vpack.c.b16 %v535, %v533
    %v602 = vpack.c.b16 %v538, %v536
    %v603 = vpack.c.b16 %v539, %v537
    %668 = vmatprep.subr.bf16.mxu0 %v555
    %669 = vmatpush1.bf16.msra.mxu0 %v554
    %670 = vmatprep.subr.bf16.mxu0 %v553
    %671 = vmatpush1.bf16.msra.mxu0 %v552
    %672 = vmatprep.subr.bf16.mxu0 %v551
    %673 = vmatpush1.bf16.msra.mxu0 %v550
    %674 = vmatprep.subr.bf16.mxu0 %v549
    %675 = vmatpush1.bf16.msra.mxu0 %v548
    %676 = vmatprep.subr.bf16.mxu0 %v547
    %677 = vmatpush1.bf16.msra.mxu0 %v546
    %678 = vmatprep.subr.bf16.mxu0 %v545
    %679 = vmatpush1.bf16.msra.mxu0 %v544
    %680 = vmatprep.subr.bf16.mxu0 %v543
    %681 = vmatpush1.bf16.msra.mxu0 %v542
    %682 = vmatprep.subr.bf16.mxu0 %v541
    %683 = vmatpush1.bf16.msra.mxu0 %v540
    %684 = vmatprep.subr.bf16.mxu0 %v571
    %685 = vmatpush2.bf16.msra.mxu0 %v570
    %686 = vmatprep.subr.bf16.mxu0 %v569
    %687 = vmatpush2.bf16.msra.mxu0 %v568
    %688 = vmatprep.subr.bf16.mxu0 %v567
    %689 = vmatpush2.bf16.msra.mxu0 %v566
    %690 = vmatprep.subr.bf16.mxu0 %v565
    %691 = vmatpush2.bf16.msra.mxu0 %v564
    %692 = vmatprep.subr.bf16.mxu0 %v563
    %693 = vmatpush2.bf16.msra.mxu0 %v562
    %694 = vmatprep.subr.bf16.mxu0 %v561
    %695 = vmatpush2.bf16.msra.mxu0 %v560
    %696 = vmatprep.subr.bf16.mxu0 %v559
    %697 = vmatpush2.bf16.msra.mxu0 %v558
    %698 = vmatprep.subr.bf16.mxu0 %v557
    %699 = vmatpush2.bf16.msra.mxu0 %v556
    %700 = vmatprep.mubr.bf16.mxu0 %v341
    %701 = vmatmul.mubr.bf16.gmra.mxu0 %v340
    %v702 = vpop.f32.mrf.mxu0
    %v703 = vadd.f32 %v327, %v702
    %v704 = vpop.f32.mrf.mxu0
    %v705 = vadd.f32 %v331, %v704
    %v706 = vpop.f32.mrf.mxu0
    %v707 = vpop.f32.mrf.mxu0
    %708 = vdwg.mxu0
    %709 = vmatprep.subr.bf16.mxu0 %v587
    %710 = vmatpush1.bf16.msra.mxu0 %v586
    %711 = vmatprep.subr.bf16.mxu0 %v585
    %712 = vmatpush1.bf16.msra.mxu0 %v584
    %713 = vmatprep.subr.bf16.mxu0 %v583
    %714 = vmatpush1.bf16.msra.mxu0 %v582
    %715 = vmatprep.subr.bf16.mxu0 %v581
    %716 = vmatpush1.bf16.msra.mxu0 %v580
    %717 = vmatprep.subr.bf16.mxu0 %v579
    %718 = vmatpush1.bf16.msra.mxu0 %v578
    %719 = vmatprep.subr.bf16.mxu0 %v577
    %720 = vmatpush1.bf16.msra.mxu0 %v576
    %721 = vmatprep.subr.bf16.mxu0 %v575
    %722 = vmatpush1.bf16.msra.mxu0 %v574
    %723 = vmatprep.subr.bf16.mxu0 %v573
    %724 = vmatpush1.bf16.msra.mxu0 %v572
    %725 = vmatprep.subr.bf16.mxu0 %v603
    %726 = vmatpush2.bf16.msra.mxu0 %v602
    %727 = vmatprep.subr.bf16.mxu0 %v601
    %728 = vmatpush2.bf16.msra.mxu0 %v600
    %729 = vmatprep.subr.bf16.mxu0 %v599
    %730 = vmatpush2.bf16.msra.mxu0 %v598
    %731 = vmatprep.subr.bf16.mxu0 %v597
    %732 = vmatpush2.bf16.msra.mxu0 %v596
    %733 = vmatprep.subr.bf16.mxu0 %v595
    %734 = vmatpush2.bf16.msra.mxu0 %v594
    %735 = vmatprep.subr.bf16.mxu0 %v593
    %736 = vmatpush2.bf16.msra.mxu0 %v592
    %737 = vmatprep.subr.bf16.mxu0 %v591
    %738 = vmatpush2.bf16.msra.mxu0 %v590
    %739 = vmatprep.subr.bf16.mxu0 %v589
    %740 = vmatpush2.bf16.msra.mxu0 %v588
    %741 = vmatprep.mubr.bf16.mxu0 %v343
    %742 = vmatmul.mubr.bf16.gmra.mxu0 %v342
    %v743 = vpop.f32.mrf.mxu0
    %v744 = vadd.f32 %v703, %v743
    %v745 = vpop.f32.mrf.mxu0
    %v746 = vadd.f32 %v705, %v745
    %v747 = vpop.f32.mrf.mxu0
    %v748 = vpop.f32.mrf.mxu0
    %749 = vdwg.mxu0
    %750 = vst [vmem:[#allocation11] sm:$0xff] %v744
    %751 = vst [vmem:[#allocation11 + $0x8] sm:$0xff] %v746
    // Predicated region
    $region42: #{tpu_custom_call.1} parent=1 // pred_check
      _
    $region43: #{tpu_custom_call.1} parent=1 // pred_check_branch
      %753 = sbr.rel (0) target = $region45
    $region44: #{tpu_custom_call.1} parent=1 // pred_region
      %s755 = ssub.s32 256, 256
      %756 = vsyncadd [#allocation5], %s755
      %s758 = sshll.u32 [#allocation11], 4
      %s759 = int_to_ptr.vmem [resolvable:$true] %s758
      %761 = dma.vmem_to_hbm [thread:$0]  %s759, 256, %s5, [#allocation5]
    $region45: #{tpu_custom_call.1} parent=1 // pred_fallthru
      _
    // Predicated region
    $region46: #{tpu_custom_call.1} parent=1 // pred_check
      _
    $region47: #{tpu_custom_call.1} parent=1 // pred_check_branch
      %763 = sbr.rel (0) target = $region49
    $region48: #{tpu_custom_call.1} parent=1 // pred_region
      %764 = dma.done [#allocation5], 256
    $region49: #{tpu_custom_call.1} parent=1 // pred_fallthru
      _
    %765 = vsyncpa [#allocation4], 1
    %766 = vsyncpa [#allocation7], 1
    %767 = vsyncpa [#allocation10], 1
    %768 = vsyncpa [#allocation5], 1

</llo_original>
